<compile_context>
chip_gen: v7x
topology: tpu7x:2x2x1
jax: 0.10.0
libtpu: 0.0.40
codegen_flags: <defaults>
</compile_context>

<pallas_src>
import jax
import jax.numpy as jnp
import numpy as np
from jax import lax
from jax.experimental import pallas as pl
from jax.experimental.pallas import tpu as pltpu


def _round_up(x, m):
    return ((x + m - 1) // m) * m


# ---------------------------------------------------------------------------
# Generic row-tiled matmul (+ optional fused bias): (M, K) @ (K, N) [+ (1, N)]
# ---------------------------------------------------------------------------
def _matmul_bias_kernel(x_ref, w_ref, b_ref, o_ref):
    acc = jnp.dot(x_ref[...], w_ref[...], preferred_element_type=jnp.float32)
    o_ref[...] = (acc + b_ref[...]).astype(o_ref.dtype)


def _matmul_kernel(x_ref, w_ref, o_ref):
    o_ref[...] = jnp.dot(x_ref[...], w_ref[...],
                         preferred_element_type=jnp.float32).astype(o_ref.dtype)


def _pallas_matmul(x, w, bias=None, *, tm=256, out_dtype=jnp.float32):
    """x: (M, K), w: (K, N), bias: (1, N) or None -> (M, N) in out_dtype."""
    M, K = x.shape
    N = w.shape[1]
    tm = min(tm, _round_up(M, 8))
    Mp = _round_up(M, tm)
    if Mp != M:
        x = jnp.pad(x, ((0, Mp - M), (0, 0)))
    grid = (Mp // tm,)

    x_spec = pl.BlockSpec((tm, K), lambda i: (i, 0))
    w_spec = pl.BlockSpec((K, N), lambda i: (0, 0))
    o_spec = pl.BlockSpec((tm, N), lambda i: (i, 0))

    if bias is not None:
        out = pl.pallas_call(
            _matmul_bias_kernel,
            out_shape=jax.ShapeDtypeStruct((Mp, N), out_dtype),
            grid_spec=pltpu.PrefetchScalarGridSpec(
                num_scalar_prefetch=0, grid=grid,
                in_specs=[x_spec, w_spec, pl.BlockSpec((1, N), lambda i: (0, 0))],
                out_specs=o_spec),
            compiler_params=pltpu.CompilerParams(
                dimension_semantics=("parallel",)),
        )(x, w, bias)
    else:
        out = pl.pallas_call(
            _matmul_kernel,
            out_shape=jax.ShapeDtypeStruct((Mp, N), out_dtype),
            grid_spec=pltpu.PrefetchScalarGridSpec(
                num_scalar_prefetch=0, grid=grid,
                in_specs=[x_spec, w_spec],
                out_specs=o_spec),
            compiler_params=pltpu.CompilerParams(
                dimension_semantics=("parallel",)),
        )(x, w)
    return out[:M] if Mp != M else out


# ---------------------------------------------------------------------------
# Sequential LSTM recurrence over a time chunk.
#   gx_ref:    (Tc, Bb, 4H)  precomputed x @ W_ih^T + (b_ih + b_hh)
#   whh_ref:   (H, 4H)       W_hh^T  (block index never changes -> stays resident)
#   h_all_ref: (Tc, Bb, H)   all hidden states for this chunk
#   h_scr/c_scr: (Bb, H) f32 state carried across time chunks
# ---------------------------------------------------------------------------
def _lstm_recurrence_kernel(gx_ref, whh_ref, h_all_ref, h_scr, c_scr):
    @pl.when(pl.program_id(1) == 0)          # new batch block -> reset state
    def _():
        h_scr[...] = jnp.zeros_like(h_scr)
        c_scr[...] = jnp.zeros_like(c_scr)

    whh = whh_ref[...]
    H = whh_ref.shape[0]
    Tc = gx_ref.shape[0]

    def step(i, carry):
        h, c = carry
        # only the recurrent matmul remains inside the loop
        gates = gx_ref[i] + jnp.dot(h.astype(whh.dtype), whh,
                                    preferred_element_type=jnp.float32)
        # PyTorch gate order: i, f, g, o  (nonlinearities / state kept in f32)
        i_g = jax.nn.sigmoid(gates[:, 0 * H:1 * H])
        f_g = jax.nn.sigmoid(gates[:, 1 * H:2 * H])
        g_g = jnp.tanh(gates[:, 2 * H:3 * H])
        o_g = jax.nn.sigmoid(gates[:, 3 * H:4 * H])
        c_new = f_g * c + i_g * g_g
        h_new = o_g * jnp.tanh(c_new)
        h_all_ref[i] = h_new.astype(h_all_ref.dtype)
        return (h_new, c_new)

    h, c = lax.fori_loop(0, Tc, step, (h_scr[...], c_scr[...]), unroll=True)
    h_scr[...] = h
    c_scr[...] = c


def lstm_with_projection(x, w_ih, w_hh, b_ih, b_hh, w_proj, *,
                         time_chunk=16, matmul_dtype=jnp.float32):
    """x: (B, T, D_in). PyTorch-convention params:
       w_ih (4H, D), w_hh (4H, H), b_ih/b_hh (4H,), w_proj (P, H).
       Returns (B, T, P), matching nn.LSTM(batch_first=True) + Linear(bias=False)."""
    B, T, D = x.shape
    H = w_hh.shape[1]
    P = w_proj.shape[0]
    f32 = jnp.float32
    mmd = matmul_dtype

    wih_t = jnp.transpose(w_ih).astype(mmd)               # (D, 4H)
    whh_t = jnp.transpose(w_hh).astype(mmd)               # (H, 4H)
    wp_t = jnp.transpose(w_proj).astype(mmd)              # (H, P)
    bias = (b_ih + b_hh).reshape(1, 4 * H).astype(f32)    # bias folded once

    # Pad batch to a sublane multiple (padded rows are independent -> sliced off)
    # and time to a multiple of the chunk (trailing pad steps never affect real ones).
    Bp = _round_up(B, 8)
    Tc = max(1, min(time_chunk, T))
    Tp = _round_up(T, Tc)
    x_tm = jnp.transpose(x, (1, 0, 2)).astype(mmd)        # (T, B, D) time-major
    x_tm = jnp.pad(x_tm, ((0, Tp - T), (0, Bp - B), (0, 0)))

    # (1) hoisted input projection + fused bias: one big matmul over all timesteps.
    gates_x = _pallas_matmul(x_tm.reshape(Tp * Bp, D), wih_t, bias,
                             out_dtype=f32).reshape(Tp, Bp, 4 * H)

    # (2) sequential recurrence, time-chunked; batch blocks form a "parallel"
    #     leading axis (sharded across TensorCores on multi-core chips).
    nb = 2 if Bp % 16 == 0 else 1
    Bb = Bp // nb

    h_all = pl.pallas_call(
        _lstm_recurrence_kernel,
        out_shape=jax.ShapeDtypeStruct((Tp, Bp, H), f32),
        grid_spec=pltpu.PrefetchScalarGridSpec(
            num_scalar_prefetch=0,
            grid=(nb, Tp // Tc),
            in_specs=[
                pl.BlockSpec((Tc, Bb, 4 * H), lambda b, t: (t, b, 0)),
                # Weight block index never changes -> fetched once, stays resident.
                # TODO(synk): at large H (f32 W_hh >= 16 MiB) on v7x, single-buffer
                # the weight (pipeline_mode=pl.Buffered(1)) / use bf16 to fit 64 MiB VMEM.
                pl.BlockSpec((H, 4 * H), lambda b, t: (0, 0)),
            ],
            out_specs=pl.BlockSpec((Tc, Bb, H), lambda b, t: (t, b, 0)),
            scratch_shapes=[
                pltpu.VMEM((Bb, H), f32),   # h carry
                pltpu.VMEM((Bb, H), f32),   # c carry
            ],
        ),
        compiler_params=pltpu.CompilerParams(
            dimension_semantics=("parallel", "arbitrary")),  # time must be sequential
    )(gates_x, whh_t)

    # (3) hoisted output projection: one big matmul over all (t, b).
    out = _pallas_matmul(h_all.reshape(Tp * Bp, H).astype(mmd), wp_t,
                         out_dtype=f32)
    out = out.reshape(Tp, Bp, P)[:T, :B]
    return jnp.transpose(out, (1, 0, 2))                   # (B, T, P)


def _reference(x, w_ih, w_hh, b_ih, b_hh, w_proj):
    """Pure-JAX reference matching PyTorch nn.LSTM (gate order i, f, g, o)."""
    B, T, D = x.shape
    H = w_hh.shape[1]

    def step(carry, x_t):
        h, c = carry
        gates = x_t @ w_ih.T + h @ w_hh.T + b_ih + b_hh
        i = jax.nn.sigmoid(gates[:, 0 * H:1 * H])
        f = jax.nn.sigmoid(gates[:, 1 * H:2 * H])
        g = jnp.tanh(gates[:, 2 * H:3 * H])
        o = jax.nn.sigmoid(gates[:, 3 * H:4 * H])
        c_new = f * c + i * g
        h_new = o * jnp.tanh(c_new)
        return (h_new, c_new), h_new

    h0 = jnp.zeros((B, H), jnp.float32)
    c0 = jnp.zeros((B, H), jnp.float32)
    (_, _), hs = jax.lax.scan(step, (h0, c0), jnp.transpose(x, (1, 0, 2)))
    return jnp.transpose(hs, (1, 0, 2)) @ w_proj.T


if __name__ == "__main__":
    # Small shapes consistent with the module's forward.
    B, T = 2, 8
    input_size, hidden_size, proj_size = 16, 32, 16

    key = jax.random.PRNGKey(0)
    k = jax.random.split(key, 6)
    s = 1.0 / np.sqrt(hidden_size)   # PyTorch-style uniform init bound
    x = jax.random.normal(k[0], (B, T, input_size), jnp.float32)
    w_ih = jax.random.uniform(k[1], (4 * hidden_size, input_size), jnp.float32, -s, s)
    w_hh = jax.random.uniform(k[2], (4 * hidden_size, hidden_size), jnp.float32, -s, s)
    b_ih = jax.random.uniform(k[3], (4 * hidden_size,), jnp.float32, -s, s)
    b_hh = jax.random.uniform(k[4], (4 * hidden_size,), jnp.float32, -s, s)
    w_proj = jax.random.uniform(k[5], (proj_size, hidden_size), jnp.float32, -s, s)

    out = lstm_with_projection(x, w_ih, w_hh, b_ih, b_hh, w_proj)
    out = jax.block_until_ready(out)
    ref = _reference(x, w_ih, w_hh, b_ih, b_hh, w_proj)
    assert out.shape == (B, T, proj_size)
    np.testing.assert_allclose(np.asarray(out), np.asarray(ref), rtol=1e-4, atol=1e-4)

    # Second config: exercises time padding, multiple time chunks, and two batch blocks.
    B2, T2 = 16, 20
    x2 = jax.random.normal(jax.random.PRNGKey(1), (B2, T2, input_size), jnp.float32)
    out2 = jax.block_until_ready(
        lstm_with_projection(x2, w_ih, w_hh, b_ih, b_hh, w_proj))
    ref2 = _reference(x2, w_ih, w_hh, b_ih, b_hh, w_proj)
    assert out2.shape == (B2, T2, proj_size)
    np.testing.assert_allclose(np.asarray(out2), np.asarray(ref2), rtol=1e-4, atol=1e-4)

    print("KERNEL_OK")
</pallas_src>

<mosaic_0001>
module attributes {stable_mosaic.version = 11 : i64} {
  func.func @_matmul_bias_kernel(%arg0: i32, %arg1: memref<64x16xf32, #tpu.memory_space<vmem>>, %arg2: memref<16x128xf32, #tpu.memory_space<vmem>>, %arg3: memref<1x128xf32, #tpu.memory_space<vmem>>, %arg4: memref<64x128xf32, #tpu.memory_space<vmem>>) attributes {dimension_semantics = [#tpu.dimension_semantics<parallel>], iteration_bounds = array<i64: 1>, scalar_prefetch = 0 : i64, scratch_operands = 0 : i64, tpu.core_type = #tpu.core_type<tc>, window_params = [{transform_indices = @transform_0, window_bounds = array<i64: 64, 16>}, {pipeline_mode = #tpu.pipeline_mode<synchronous>, transform_indices = @transform_1, window_bounds = array<i64: 16, 128>}, {pipeline_mode = #tpu.pipeline_mode<synchronous>, transform_indices = @transform_2, window_bounds = array<i64: 1, 128>}, {transform_indices = @transform_3, window_bounds = array<i64: 64, 128>}]} {
    %c0 = arith.constant 0 : index
    %c0_0 = arith.constant 0 : index
    %0 = vector.load %arg1[%c0, %c0_0] : memref<64x16xf32, #tpu.memory_space<vmem>>, vector<64x16xf32>
    %c0_1 = arith.constant 0 : index
    %c0_2 = arith.constant 0 : index
    %1 = vector.load %arg2[%c0_1, %c0_2] : memref<16x128xf32, #tpu.memory_space<vmem>>, vector<16x128xf32>
    %cst = arith.constant dense<0.000000e+00> : vector<64x128xf32>
    %2 = tpu.matmul %0, %1, %cst {dimension_numbers = #tpu.dot_dimension_numbers<[1], [0], [0], [1], [0, 0, 1, 1], [], []>} : vector<64x16xf32>, vector<16x128xf32>, vector<64x128xf32> -> vector<64x128xf32>
    %c0_3 = arith.constant 0 : index
    %c0_4 = arith.constant 0 : index
    %3 = vector.load %arg3[%c0_3, %c0_4] : memref<1x128xf32, #tpu.memory_space<vmem>>, vector<1x128xf32>
    %4 = vector.broadcast %3 : vector<1x128xf32> to vector<64x128xf32>
    %5 = arith.addf %2, %4 : vector<64x128xf32>
    %c0_5 = arith.constant 0 : index
    %c0_6 = arith.constant 0 : index
    %6 = vector.load %arg4[%c0_5, %c0_6] : memref<64x128xf32, #tpu.memory_space<vmem>>, vector<64x128xf32>
    tpu.vector_store %arg4[%c0_5, %c0_6], %5 {strides = array<i32>} : memref<64x128xf32, #tpu.memory_space<vmem>>, vector<64x128xf32>,
    return
  }
  func.func @transform_0(%arg0: i32) -> (i32, i32) {
    %c0_i32 = arith.constant 0 : i32
    %c0_i32_0 = arith.constant 0 : i32
    return %arg0, %c0_i32 : i32, i32
  }
  func.func @transform_1(%arg0: i32) -> (i32, i32) {
    %c0_i32 = arith.constant 0 : i32
    %c0_i32_0 = arith.constant 0 : i32
    %c0_i32_1 = arith.constant 0 : i32
    return %c0_i32, %c0_i32_0 : i32, i32
  }
  func.func @transform_2(%arg0: i32) -> (i32, i32) {
    %c0_i32 = arith.constant 0 : i32
    %c0_i32_0 = arith.constant 0 : i32
    %c0_i32_1 = arith.constant 0 : i32
    return %c0_i32, %c0_i32_0 : i32, i32
  }
  func.func @transform_3(%arg0: i32) -> (i32, i32) {
    %c0_i32 = arith.constant 0 : i32
    %c0_i32_0 = arith.constant 0 : i32
    return %arg0, %c0_i32 : i32, i32
  }
}

</mosaic_0001>

<llo_original>
// kernel: tpu_custom_call.1
$region0: #{tpu_custom_call.1}
  #allocation0 [shape = 'u32[]', space=smem, size = 0x4, offset = 0x4, fixed_abs, tag = 'smem constant byte address 0x4 - core index']
  #allocation1 [shape = 'u32[144,128]{1,0:T(1,128)}', space=vmem, size = 0x12000, scoped, tag = 'internal scratch']
  %s0 = inlined_call_operand.vmem [shape: f32[64,16], index: 0, kind: input, shape index: {}]
  %s1 = inlined_call_operand.vmem [shape: f32[16,128], index: 1, kind: input, shape index: {}]
  %s2 = inlined_call_operand.vmem [shape: f32[1,128], index: 2, kind: input, shape index: {}]
  %s3 = inlined_call_operand.hbm [shape: f32[64,128], index: 3, kind: output, shape index: {}]
  %s4 = sld [smem:[#allocation0]]
  $region22: #{tpu_custom_call.1} parent=0
    _
  %s6 = ssub.s32 1, %s4
  %s7 = scalar_select 0, %s6, %s4
  $region1: #{tpu_custom_call.1} parent=0
    #allocation2 [shape = 'u8[32768]{0}', space=vmem, size = 0x8000, scoped, tag = 'output window, operand 0, single buffered']
    #allocation3 [shape = 's32[1]{0}', space=sflag, size = 0x4, scoped, tag = 'scoped memory for tpu_custom_call.1']
    %8 = vsyncpa [#allocation3], 0
    // Predicated region
    $region2: #{tpu_custom_call.1} parent=1 // pred_check
      _
    $region3: #{tpu_custom_call.1} parent=1 // pred_check_branch
      %10 = sbr.rel (0) target = $region5
    $region4: #{tpu_custom_call.1} parent=1 // pred_region
      _
    $region5: #{tpu_custom_call.1} parent=1 // pred_fallthru
      _
    // Predicated region
    $region6: #{tpu_custom_call.1} parent=1 // pred_check
      _
    $region7: #{tpu_custom_call.1} parent=1 // pred_check_branch
      %12 = sbr.rel (0) target = $region9
    $region8: #{tpu_custom_call.1} parent=1 // pred_region
      _
    $region9: #{tpu_custom_call.1} parent=1 // pred_fallthru
      _
    // Predicated region
    $region10: #{tpu_custom_call.1} parent=1 // pred_check
      _
    $region11: #{tpu_custom_call.1} parent=1 // pred_check_branch
      %14 = sbr.rel (0) target = $region13
    $region12: #{tpu_custom_call.1} parent=1 // pred_region
      _
    $region13: #{tpu_custom_call.1} parent=1 // pred_fallthru
      _
    %v15 = vld [vmem:[%s0] sm:$0xff]
    %v16 = vld [vmem:[%s0 + $0x8] sm:$0xff]
    %v17 = vld [vmem:[%s0 + $0x10] sm:$0xff]
    %v18 = vld [vmem:[%s0 + $0x18] sm:$0xff]
    %v19 = vld [vmem:[%s0 + $0x20] sm:$0xff]
    %v20 = vld [vmem:[%s0 + $0x28] sm:$0xff]
    %v21 = vld [vmem:[%s0 + $0x30] sm:$0xff]
    %v22 = vld [vmem:[%s0 + $0x38] sm:$0xff]
    %v23 = vld [vmem:[%s1] sm:$0xff]
    %v24 = vld [vmem:[%s1 + $0x8] sm:$0xff]
    %v25 = vld [vmem:[%s2] sm:$0x1]
    %v27 = vlaneseq
    %v28 = vshrl.u32 %v27, 7
    %v29 = vsub.s32 0, %v28
    %v30 = vrot.slane %v25, %v29
    %vm32 = vcmask 130048
    %v34 = vsel %vm32, %v15, 0
    %v37 = vsel %vm32, %v16, 0
    %v40 = vsel %vm32, %v17, 0
    %v43 = vsel %vm32, %v18, 0
    %v46 = vsel %vm32, %v19, 0
    %v49 = vsel %vm32, %v20, 0
    %v52 = vsel %vm32, %v21, 0
    %v55 = vsel %vm32, %v22, 0
    %57 = vmatprep.subr.mxu0 0.0
    %58 = vmatpush1.msra.mxu0 %v23
    %59 = vmatprep.subr.mxu0 0.0
    %60 = vmatpush1.msra.mxu0 %v24
    %61 = vmatprep.subr.mxu0 0.0
    %62 = vmatpush1.msra.mxu0 0.0
    %63 = vmatprep.subr.mxu0 0.0
    %64 = vmatpush1.msra.mxu0 0.0
    %65 = vmatprep.subr.mxu0 0.0
    %66 = vmatpush1.msra.mxu0 0.0
    %67 = vmatprep.subr.mxu0 0.0
    %68 = vmatpush1.msra.mxu0 0.0
    %69 = vmatprep.subr.mxu0 0.0
    %70 = vmatpush1.msra.mxu0 0.0
    %71 = vmatprep.subr.mxu0 0.0
    %72 = vmatpush1.msra.mxu0 0.0
    %73 = vmatprep.subr.mxu0 0.0
    %74 = vmatpush1.msra.mxu0 0.0
    %75 = vmatprep.subr.mxu0 0.0
    %76 = vmatpush1.msra.mxu0 0.0
    %77 = vmatprep.subr.mxu0 0.0
    %78 = vmatpush1.msra.mxu0 0.0
    %79 = vmatprep.subr.mxu0 0.0
    %80 = vmatpush1.msra.mxu0 0.0
    %81 = vmatprep.subr.mxu0 0.0
    %82 = vmatpush1.msra.mxu0 0.0
    %83 = vmatprep.subr.mxu0 0.0
    %84 = vmatpush1.msra.mxu0 0.0
    %85 = vmatprep.subr.mxu0 0.0
    %86 = vmatpush1.msra.mxu0 0.0
    %87 = vmatprep.subr.mxu0 0.0
    %88 = vmatpush1.msra.mxu0 0.0
    %89 = vmatprep.subr.mxu0 0.0
    %90 = vmatpush1.msra.mxu0 0.0
    %91 = vmatprep.subr.mxu0 0.0
    %92 = vmatpush1.msra.mxu0 0.0
    %93 = vmatprep.subr.mxu0 0.0
    %94 = vmatpush1.msra.mxu0 0.0
    %95 = vmatprep.subr.mxu0 0.0
    %96 = vmatpush1.msra.mxu0 0.0
    %97 = vmatprep.subr.mxu0 0.0
    %98 = vmatpush1.msra.mxu0 0.0
    %99 = vmatprep.subr.mxu0 0.0
    %100 = vmatpush1.msra.mxu0 0.0
    %101 = vmatprep.subr.mxu0 0.0
    %102 = vmatpush1.msra.mxu0 0.0
    %103 = vmatprep.subr.mxu0 0.0
    %104 = vmatpush1.msra.mxu0 0.0
    %105 = vmatprep.subr.mxu0 0.0
    %106 = vmatpush1.msra.mxu0 0.0
    %107 = vmatprep.subr.mxu0 0.0
    %108 = vmatpush1.msra.mxu0 0.0
    %109 = vmatprep.subr.mxu0 0.0
    %110 = vmatpush1.msra.mxu0 0.0
    %111 = vmatprep.subr.mxu0 0.0
    %112 = vmatpush1.msra.mxu0 0.0
    %113 = vmatprep.subr.mxu0 0.0
    %114 = vmatpush1.msra.mxu0 0.0
    %115 = vmatprep.subr.mxu0 0.0
    %116 = vmatpush1.msra.mxu0 0.0
    %117 = vmatprep.subr.mxu0 0.0
    %118 = vmatpush1.msra.mxu0 0.0
    %119 = vmatprep.subr.mxu0 0.0
    %120 = vmatpush1.msra.mxu0 0.0
    %121 = vmatprep.mubr.f32.mxu0 0.0
    %122 = vmatmul.mubr.f32.gmra.mrb[0].mxu0 %v34
    %v123 = vpop.f32.mrb[0].mxu0
    %v124 = vadd.f32 %v30, %v123
    %v125 = vpop.f32.mrb[0].mxu0
    %126 = vmatprep.mubr.f32.mxu0 0.0
    %127 = vmatmul.mubr.f32.gmra.mrb[0].mxu0 %v37
    %v128 = vpop.f32.mrb[0].mxu0
    %v129 = vadd.f32 %v30, %v128
    %v130 = vpop.f32.mrb[0].mxu0
    %131 = vmatprep.mubr.f32.mxu0 0.0
    %132 = vmatmul.mubr.f32.gmra.mrb[0].mxu0 %v40
    %v133 = vpop.f32.mrb[0].mxu0
    %v134 = vadd.f32 %v30, %v133
    %v135 = vpop.f32.mrb[0].mxu0
    %136 = vmatprep.mubr.f32.mxu0 0.0
    %137 = vmatmul.mubr.f32.gmra.mrb[0].mxu0 %v43
    %v138 = vpop.f32.mrb[0].mxu0
    %v139 = vadd.f32 %v30, %v138
    %v140 = vpop.f32.mrb[0].mxu0
    %141 = vmatprep.mubr.f32.mxu0 0.0
    %142 = vmatmul.mubr.f32.gmra.mrb[0].mxu0 %v46
    %v143 = vpop.f32.mrb[0].mxu0
    %v144 = vadd.f32 %v30, %v143
    %v145 = vpop.f32.mrb[0].mxu0
    %146 = vmatprep.mubr.f32.mxu0 0.0
    %147 = vmatmul.mubr.f32.gmra.mrb[0].mxu0 %v49
    %v148 = vpop.f32.mrb[0].mxu0
    %v149 = vadd.f32 %v30, %v148
    %v150 = vpop.f32.mrb[0].mxu0
    %151 = vmatprep.mubr.f32.mxu0 0.0
    %152 = vmatmul.mubr.f32.gmra.mrb[0].mxu0 %v52
    %v153 = vpop.f32.mrb[0].mxu0
    %v154 = vadd.f32 %v30, %v153
    %v155 = vpop.f32.mrb[0].mxu0
    %156 = vmatprep.mubr.f32.mxu0 0.0
    %157 = vmatmul.mubr.f32.gmra.mrb[0].mxu0 %v55
    %v158 = vpop.f32.mrb[0].mxu0
    %v159 = vadd.f32 %v30, %v158
    %v160 = vpop.f32.mrb[0].mxu0
    %161 = vdwg.mxu0
    %162 = vst [vmem:[#allocation2] sm:$0xff] %v124
    %163 = vst [vmem:[#allocation2 + $0x8] sm:$0xff] %v129
    %164 = vst [vmem:[#allocation2 + $0x10] sm:$0xff] %v134
    %165 = vst [vmem:[#allocation2 + $0x18] sm:$0xff] %v139
    %166 = vst [vmem:[#allocation2 + $0x20] sm:$0xff] %v144
    %167 = vst [vmem:[#allocation2 + $0x28] sm:$0xff] %v149
    %168 = vst [vmem:[#allocation2 + $0x30] sm:$0xff] %v154
    %169 = vst [vmem:[#allocation2 + $0x38] sm:$0xff] %v159
    // Predicated region
    $region14: #{tpu_custom_call.1} parent=1 // pred_check
      _
    $region15: #{tpu_custom_call.1} parent=1 // pred_check_branch
      %171 = sbr.rel (0) target = $region17
    $region16: #{tpu_custom_call.1} parent=1 // pred_region
      %s173 = ssub.s32 1024, 1024
      %174 = vsyncadd [#allocation3], %s173
      %s175 = sshll.u32 [#allocation2], 4
      %s176 = int_to_ptr.vmem [resolvable:$true] %s175
      %181 = dma.vmem_to_hbm [thread:$0]  %s176, 1024, %s3, [#allocation3], 128, 128, 8
    $region17: #{tpu_custom_call.1} parent=1 // pred_fallthru
      _
    // Predicated region
    $region18: #{tpu_custom_call.1} parent=1 // pred_check
      _
    $region19: #{tpu_custom_call.1} parent=1 // pred_check_branch
      %183 = sbr.rel (0) target = $region21
    $region20: #{tpu_custom_call.1} parent=1 // pred_region
      %184 = dma.done [#allocation3], 1024
    $region21: #{tpu_custom_call.1} parent=1 // pred_fallthru
      _
    %185 = vsyncpa [#allocation3], 1

</llo_original>
